<compile_context>
chip_gen: v7x
topology: tpu7x:2x2x1
jax: 0.10.0
libtpu: 0.0.40
codegen_flags: <defaults>
</compile_context>

<pallas_src>
import functools

import jax
import jax.numpy as jnp
from jax import lax
from jax.experimental import pallas as pl
from jax.experimental.pallas import tpu as pltpu


# ----------------------------------------------------------------------------
# Host-side combinatorics (mirrors the PyTorch module; no Pallas equivalent).
# ----------------------------------------------------------------------------
def get_factor_lst(value):
    assert isinstance(value, int) and value >= 1
    ret = []
    i = 1
    while i * i <= value:
        if value % i == 0:
            ret.append(i)
            if i != value // i:
                ret.append(value // i)
        i += 1
    return sorted(ret)


def split_tail(factor_lst):
    ret = []
    for tp in factor_lst:
        if len(tp) < 1:
            raise RuntimeWarning('factor lst is empty')
        tail = tp[-1]
        for sub_factor in get_factor_lst(tail):
            ret.append((*tp[:-1], tail // sub_factor, sub_factor))
    return ret


# ----------------------------------------------------------------------------
# Pallas kernel: uniform randoms in [0,1) + first-index argmax over N values.
# ----------------------------------------------------------------------------
def _rand_argmax_kernel(seed_ref, vals_ref, idx_ref, *, n: int):
    # seed_ref: SMEM (1,)   int32  — RNG seed
    # vals_ref: VMEM (1, P) float32 (P % 128 == 0 → lane-dense unmasked stores)
    # idx_ref : VMEM (1, 1) int32   — argmax over the first n lanes
    n_pad = vals_ref.shape[1]
    seed = seed_ref[0]

    lane = lax.broadcasted_iota(jnp.int32, (1, n_pad), 1)

    # Counter-based integer hash (Wang-style) on the VPU, seeded from SMEM.
    # int32 with wrap-around; masks after `>>` emulate logical shifts.
    h = lane * 0x61C88647 + seed
    h = (h ^ 61) ^ ((h >> 16) & 0xFFFF)
    h = h * 9
    h = h ^ ((h >> 4) & 0x0FFFFFFF)
    h = h * 0x27D4EB2D
    h = h ^ ((h >> 15) & 0x1FFFF)

    mant = (h >> 9) & 0x7FFFFF                       # 23 random bits, >= 0
    vals = mant.astype(jnp.float32) * (1.0 / (1 << 23))  # uniform in [0, 1)
    vals_ref[...] = vals

    # First-index argmax over the n valid lanes (pads masked below any value).
    masked = jnp.where(lane < n, vals, -1.0)
    m = jnp.max(masked, axis=-1, keepdims=True)              # (1, 1)
    idx = jnp.min(jnp.where(masked >= m, lane, n_pad),
                  axis=-1, keepdims=True)                    # (1, 1) int32
    idx_ref[...] = idx.astype(jnp.int32)


def _rand_and_argmax(n: int, seed: int):
    """Returns (vals[:n] float32 in [0,1), argmax index as python int)."""
    assert n >= 1
    n_pad = max(128, ((n + 127) // 128) * 128)   # lane-dense output width
    seed_arr = jnp.asarray([seed], dtype=jnp.int32)
    kernel = functools.partial(_rand_argmax_kernel, n=n)
    vals_pad, idx = pl.pallas_call(
        kernel,
        out_shape=(
            jax.ShapeDtypeStruct((1, n_pad), jnp.float32),
            jax.ShapeDtypeStruct((1, 1), jnp.int32),
        ),
        in_specs=[pl.BlockSpec(memory_space=pltpu.MemorySpace.SMEM)],
        out_specs=(
            pl.BlockSpec(memory_space=pltpu.MemorySpace.VMEM),
            pl.BlockSpec(memory_space=pltpu.MemorySpace.VMEM),
        ),
    )(seed_arr)
    return vals_pad[0, :n], int(jax.device_get(idx)[0, 0])


# ----------------------------------------------------------------------------
# Module wrapper (mirrors RASDx).
# ----------------------------------------------------------------------------
class RASDxPallas:
    def __init__(self, x):
        if not isinstance(x, int) or x < 1:
            self.x = 1
            raise RuntimeWarning('split number x should be int and x >= 1')
        else:
            self.x = x

    def forward(self, extent, seed=0):
        # TODO(synk): candidate enumeration (divisor search + tuple splitting) is
        # data-dependent host-side Python in the reference and has no Pallas
        # equivalent; it stays on the host. The tensor work (rand + argmax) runs
        # in the Pallas kernel.
        candidates = [(extent,)]
        for _ in range(1, self.x):
            candidates = split_tail(candidates)
        n = len(candidates)
        vals, best_idx = _rand_and_argmax(n, seed)
        return vals, candidates[best_idx]


if __name__ == "__main__":
    key = jax.random.PRNGKey(0)
    seed = int(jax.random.randint(key, (), 0, 2**31 - 1))

    extent, x = 36, 3
    module = RASDxPallas(x)
    vals, best = module.forward(extent, seed=seed)
    vals = jax.block_until_ready(vals)

    # Re-derive candidates on the host to verify the result.
    candidates = [(extent,)]
    for _ in range(1, x):
        candidates = split_tail(candidates)

    assert vals.shape == (len(candidates),)
    assert vals.dtype == jnp.float32
    v = jax.device_get(vals)
    assert (v >= 0.0).all() and (v < 1.0).all()
    # Returned candidate must be the argmax of the returned random values.
    assert best == candidates[int(jnp.argmax(vals))]
    # Every candidate is a valid x-way factorization of extent.
    assert len(best) == x
    prod = 1
    for f in best:
        prod *= f
    assert prod == extent

    print("KERNEL_OK")
</pallas_src>

<mosaic_0001>
module attributes {stable_mosaic.version = 11 : i64} {
  func.func @_rand_argmax_kernel(%arg0: memref<1xi32, #tpu.memory_space<smem>>, %arg1: memref<1x128xf32, #tpu.memory_space<vmem>>, %arg2: memref<1x1xi32, #tpu.memory_space<vmem>>) attributes {dimension_semantics = [], scalar_prefetch = 0 : i64, scratch_operands = 0 : i64, tpu.core_type = #tpu.core_type<tc>} {
    %c0 = arith.constant 0 : index
    %0 = memref.load %arg0[%c0] : memref<1xi32, #tpu.memory_space<smem>>
    %1 = tpu.iota {dimensions = array<i32: 1>} : vector<1x128xi32>
    %c1640531527_i32 = arith.constant 1640531527 : i32
    %2 = vector.broadcast %c1640531527_i32 : i32 to vector<1x128xi32>
    %3 = arith.muli %1, %2 : vector<1x128xi32>
    %4 = vector.broadcast %0 : i32 to vector<1x128xi32>
    %5 = arith.addi %3, %4 : vector<1x128xi32>
    %c61_i32 = arith.constant 61 : i32
    %6 = vector.broadcast %c61_i32 : i32 to vector<1x128xi32>
    %7 = arith.xori %5, %6 : vector<1x128xi32>
    %c16_i32 = arith.constant 16 : i32
    %8 = vector.broadcast %c16_i32 : i32 to vector<1x128xi32>
    %9 = arith.shrsi %5, %8 : vector<1x128xi32>
    %c65535_i32 = arith.constant 65535 : i32
    %10 = vector.broadcast %c65535_i32 : i32 to vector<1x128xi32>
    %11 = arith.andi %9, %10 : vector<1x128xi32>
    %12 = arith.xori %7, %11 : vector<1x128xi32>
    %c9_i32 = arith.constant 9 : i32
    %13 = vector.broadcast %c9_i32 : i32 to vector<1x128xi32>
    %14 = arith.muli %12, %13 : vector<1x128xi32>
    %c4_i32 = arith.constant 4 : i32
    %15 = vector.broadcast %c4_i32 : i32 to vector<1x128xi32>
    %16 = arith.shrsi %14, %15 : vector<1x128xi32>
    %c268435455_i32 = arith.constant 268435455 : i32
    %17 = vector.broadcast %c268435455_i32 : i32 to vector<1x128xi32>
    %18 = arith.andi %16, %17 : vector<1x128xi32>
    %19 = arith.xori %14, %18 : vector<1x128xi32>
    %c668265261_i32 = arith.constant 668265261 : i32
    %20 = vector.broadcast %c668265261_i32 : i32 to vector<1x128xi32>
    %21 = arith.muli %19, %20 : vector<1x128xi32>
    %c15_i32 = arith.constant 15 : i32
    %22 = vector.broadcast %c15_i32 : i32 to vector<1x128xi32>
    %23 = arith.shrsi %21, %22 : vector<1x128xi32>
    %c131071_i32 = arith.constant 131071 : i32
    %24 = vector.broadcast %c131071_i32 : i32 to vector<1x128xi32>
    %25 = arith.andi %23, %24 : vector<1x128xi32>
    %26 = arith.xori %21, %25 : vector<1x128xi32>
    %c9_i32_0 = arith.constant 9 : i32
    %27 = vector.broadcast %c9_i32_0 : i32 to vector<1x128xi32>
    %28 = arith.shrsi %26, %27 : vector<1x128xi32>
    %c8388607_i32 = arith.constant 8388607 : i32
    %29 = vector.broadcast %c8388607_i32 : i32 to vector<1x128xi32>
    %30 = arith.andi %28, %29 : vector<1x128xi32>
    %31 = arith.sitofp %30 : vector<1x128xi32> to vector<1x128xf32>
    %cst = arith.constant 1.1920929E-7 : f32
    %32 = vector.broadcast %cst : f32 to vector<1x128xf32>
    %33 = arith.mulf %31, %32 : vector<1x128xf32>
    %c0_1 = arith.constant 0 : index
    %c0_2 = arith.constant 0 : index
    %34 = vector.load %arg1[%c0_1, %c0_2] : memref<1x128xf32, #tpu.memory_space<vmem>>, vector<1x128xf32>
    tpu.vector_store %arg1[%c0_1, %c0_2], %33 {strides = array<i32>} : memref<1x128xf32, #tpu.memory_space<vmem>>, vector<1x128xf32>,
    %c36_i32 = arith.constant 36 : i32
    %35 = vector.broadcast %c36_i32 : i32 to vector<1x128xi32>
    %36 = arith.cmpi slt, %1, %35 : vector<1x128xi32>
    %cst_3 = arith.constant -1.000000e+00 : f32
    %37 = vector.broadcast %cst_3 : f32 to vector<1x128xf32>
    %38 = arith.select %36, %33, %37 : vector<1x128xi1>, vector<1x128xf32>
    %cst_4 = arith.constant dense<0xFF800000> : vector<1xf32>
    %39 = vector.multi_reduction <maximumf>, %38, %cst_4 [1] : vector<1x128xf32> to vector<1xf32>
    %40 = vector.shape_cast %39 : vector<1xf32> to vector<1x1xf32>
    %41 = vector.broadcast %40 : vector<1x1xf32> to vector<1x128xf32>
    %42 = arith.cmpf oge, %38, %41 : vector<1x128xf32>
    %c128_i32 = arith.constant 128 : i32
    %43 = vector.broadcast %c128_i32 : i32 to vector<1x128xi32>
    %44 = arith.select %42, %1, %43 : vector<1x128xi1>, vector<1x128xi32>
    %cst_5 = arith.constant dense<2147483647> : vector<1xi32>
    %45 = vector.multi_reduction <minsi>, %44, %cst_5 [1] : vector<1x128xi32> to vector<1xi32>
    %46 = vector.shape_cast %45 : vector<1xi32> to vector<1x1xi32>
    %c0_6 = arith.constant 0 : index
    %c0_7 = arith.constant 0 : index
    %47 = vector.load %arg2[%c0_6, %c0_7] : memref<1x1xi32, #tpu.memory_space<vmem>>, vector<1x1xi32>
    tpu.vector_store %arg2[%c0_6, %c0_7], %46 {strides = array<i32>} : memref<1x1xi32, #tpu.memory_space<vmem>>, vector<1x1xi32>,
    return
  }
}

</mosaic_0001>

<llo_original>
// kernel: tpu_custom_call.1
$region0: #{tpu_custom_call.1}
  #allocation0 [shape = 'u32[]', space=smem, size = 0x4, offset = 0x4, fixed_abs, tag = 'smem constant byte address 0x4 - core index']
  #allocation1 [shape = 'u32[144,128]{1,0:T(1,128)}', space=vmem, size = 0x12000, scoped, tag = 'internal scratch']
  #allocation2 [shape = 's32[1]{0:T(128)S(6)}', space=smem, size = 0x200, scoped, tag = 'scoped memory for tpu_custom_call.1']
  %s0 = inlined_call_operand.<no memory space> [shape: s32[1], index: 0, kind: input, shape index: {}]
  %s1 = inlined_call_operand.hbm [shape: f32[1,128], index: 1, kind: output, shape index: {0}]
  %s2 = inlined_call_operand.hbm [shape: s32[1,1], index: 2, kind: output, shape index: {1}]
  %3 = xla_tuple %s1, %s2
  %s4 = sld [smem:[#allocation0]]
  $region22: #{tpu_custom_call.1} parent=0
    _
  %s6 = ssub.s32 1, %s4
  %s7 = scalar_select 0, %s6, %s4
  %8 = sst [smem:[#allocation2]] %s0
  $region1: #{tpu_custom_call.1} parent=0
    #allocation3 [shape = 'u8[512]{0}', space=vmem, size = 0x400, scoped, tag = 'output window, operand 0, single buffered']
    #allocation4 [shape = 's32[1]{0}', space=sflag, size = 0x4, scoped, tag = 'scoped memory for tpu_custom_call.1']
    #allocation5 [shape = 'u8[512]{0}', space=vmem, size = 0x400, scoped, tag = 'output window, operand 1, single buffered']
    #allocation6 [shape = 's32[1]{0}', space=sflag, size = 0x4, scoped, tag = 'scoped memory for tpu_custom_call.1']
    %9 = vsyncpa [#allocation4], 0
    %10 = vsyncpa [#allocation6], 0
    // Predicated region
    $region2: #{tpu_custom_call.1} parent=1 // pred_check
      _
    $region3: #{tpu_custom_call.1} parent=1 // pred_check_branch
      %12 = sbr.rel (0) target = $region5
    $region4: #{tpu_custom_call.1} parent=1 // pred_region
      _
    $region5: #{tpu_custom_call.1} parent=1 // pred_fallthru
      _
    %s13 = sld [smem:[#allocation2]]
    %v14 = vlaneseq
    %v15 = vand.u32 %v14, 127
    %v16 = vmul.u32 %v15, 1640531527
    %v17 = vstv %s13
    %v18 = vadd.s32 %v16, %v17
    %v19 = vxor.u32 %v18, 61
    %v20 = vshra.s32 %v18, 16
    %v21 = vand.u32 %v20, 65535
    %v22 = vxor.u32 %v19, %v21
    %v23 = vmul.u32 %v22, 9
    %v24 = vshra.s32 %v23, 4
    %v25 = vand.u32 %v24, 268435455
    %v26 = vxor.u32 %v23, %v25
    %v27 = vmul.u32 %v26, 668265261
    %v28 = vshra.s32 %v27, 15
    %v29 = vand.u32 %v28, 131071
    %v30 = vxor.u32 %v27, %v29
    %v31 = vshra.s32 %v30, 9
    %v32 = vand.u32 %v31, 8388607
    %v33 = vcvt.s32.f32 %v32
    %v34 = vmul.f32 %v33, 1.1920929e-07
    %35 = vst [vmem:[#allocation3] sm:$0x1] %v34
    %vm36 = vcmp.lt.s32.totalorder %v15, 36
    %v37 = vsel %vm36, %v34, -1.0
    %38 = vmax.xlane.f32.xlu0 %v37
    %v39 = vpop.xlane.xlu0 %38
    %vm40 = vcmp.ge.f32.partialorder %v37, %v39
    %v41 = vsel %vm40, %v15, 128
    %v42 = vand.u32 %v41, 65535
    %v43 = vshra.s32 %v41, 16
    %v44 = vcvt.s32.f32 %v42
    %v45 = vcvt.s32.f32 %v43
    %46 = vmin.xlane.f32.xlu0 %v45
    %v47 = vpop.xlane.xlu0 %46
    %vm48 = vcmp.eq.f32.partialorder %v45, %v47
    %v49 = vsel %vm48, %v44, inf
    %50 = vmin.xlane.f32.xlu0 %v49
    %v51 = vpop.xlane.xlu0 %50
    %v52 = vcvt.f32.s32 %v51
    %v53 = vcvt.f32.s32 %v47
    %v54 = vshll.u32 %v53, 16
    %v55 = vadd.s32 %v54, %v52
    %vm56 = vcmask 0
    %57 = vst.msk [vmem:[#allocation5] sm:$0x1] %vm56, %v55
    // Predicated region
    $region6: #{tpu_custom_call.1} parent=1 // pred_check
      _
    $region7: #{tpu_custom_call.1} parent=1 // pred_check_branch
      %59 = sbr.rel (0) target = $region9
    $region8: #{tpu_custom_call.1} parent=1 // pred_region
      %s61 = ssub.s32 16, 16
      %62 = vsyncadd [#allocation4], %s61
      %s64 = sshll.u32 [#allocation3], 4
      %s65 = int_to_ptr.vmem [resolvable:$true] %s64
      %67 = dma.vmem_to_hbm [thread:$0]  %s65, 16, %s1, [#allocation4]
    $region9: #{tpu_custom_call.1} parent=1 // pred_fallthru
      _
    // Predicated region
    $region10: #{tpu_custom_call.1} parent=1 // pred_check
      _
    $region11: #{tpu_custom_call.1} parent=1 // pred_check_branch
      %69 = sbr.rel (0) target = $region13
    $region12: #{tpu_custom_call.1} parent=1 // pred_region
      %s71 = ssub.s32 16, 16
      %72 = vsyncadd [#allocation6], %s71
      %s74 = sshll.u32 [#allocation5], 4
      %s75 = int_to_ptr.vmem [resolvable:$true] %s74
      %77 = dma.vmem_to_hbm [thread:$0]  %s75, 16, %s2, [#allocation6]
    $region13: #{tpu_custom_call.1} parent=1 // pred_fallthru
      _
    // Predicated region
    $region14: #{tpu_custom_call.1} parent=1 // pred_check
      _
    $region15: #{tpu_custom_call.1} parent=1 // pred_check_branch
      %79 = sbr.rel (0) target = $region17
    $region16: #{tpu_custom_call.1} parent=1 // pred_region
      %80 = dma.done [#allocation4], 16
    $region17: #{tpu_custom_call.1} parent=1 // pred_fallthru
      _
    // Predicated region
    $region18: #{tpu_custom_call.1} parent=1 // pred_check
      _
    $region19: #{tpu_custom_call.1} parent=1 // pred_check_branch
      %82 = sbr.rel (0) target = $region21
    $region20: #{tpu_custom_call.1} parent=1 // pred_region
      %83 = dma.done [#allocation6], 16
    $region21: #{tpu_custom_call.1} parent=1 // pred_fallthru
      _
    %84 = vsyncpa [#allocation4], 1
    %85 = vsyncpa [#allocation6], 1

</llo_original>
